<compile_context>
chip_gen: v7x
topology: tpu7x:2x2x1
jax: 0.10.0
libtpu: 0.0.40
codegen_flags: <defaults>
</compile_context>

<pallas_src>
import functools

import jax
import jax.numpy as jnp
from jax.experimental import pallas as pl
from jax.experimental.pallas import tpu as pltpu

_EPS = 1e-12  # matches torch.nn.functional.normalize eps


def _round_up(x, m):
    return ((x + m - 1) // m) * m


# --------------------------------------------------------------------------- #
# Kernel
# --------------------------------------------------------------------------- #
def ance_loss_kernel(flat_ref, invc_ref, out_ref, *,
                     margin, batch, block_b, d, num_pos, num_neg):
    """One batch tile of the ANCE margin-ranking loss.

    flat_ref : (block_b, (1+P+N)*d)  query | masked positives | negatives
    invc_ref : (block_b, 1) f32      1 / max(count_positive, 1)
    out_ref  : (1, 8, 128) f32       per-tile partial hinge sum (broadcast)
    """
    i = pl.program_id(0)
    eps2 = _EPS * _EPS

    # query slice, upcast per-vreg at the multiply (accurate norms for bf16)
    q = flat_ref[:, 0:d].astype(jnp.float32)                       # (tb, d)
    q_sq = jnp.sum(q * q, axis=-1, keepdims=True)                  # (tb, 1)
    inv_q = jax.lax.rsqrt(jnp.maximum(q_sq, eps2))                 # (tb, 1)

    def dot_over_norm(slice_idx):
        # fused VPU multiply + XLU lane-reduce: dot(q, x) / max(||x||, eps)
        off = slice_idx * d                                        # static, 128-aligned
        x = flat_ref[:, off:off + d].astype(jnp.float32)           # (tb, d)
        dot = jnp.sum(x * q, axis=-1, keepdims=True)               # (tb, 1)
        sq = jnp.sum(x * x, axis=-1, keepdims=True)                # (tb, 1)
        return dot * jax.lax.rsqrt(jnp.maximum(sq, eps2))          # (tb, 1)

    # positives: padding positives were zeroed by the mask on the host,
    # so they contribute exactly 0 here (dot == 0).
    pos_sum = jnp.zeros((block_b, 1), jnp.float32)
    for p in range(num_pos):
        pos_sum = pos_sum + dot_over_norm(1 + p)
    avg_pos = pos_sum * inv_q * invc_ref[...]                      # (tb, 1)

    # negatives: MarginRankingLoss(margin), target = 1
    hinge_sum = jnp.zeros((block_b, 1), jnp.float32)
    for n in range(num_neg):
        score = dot_over_norm(1 + num_pos + n) * inv_q             # (tb, 1)
        hinge_sum = hinge_sum + jnp.maximum(score - avg_pos + margin, 0.0)

    # zero contributions of batch-padding rows (only emitted if padding exists)
    if batch % block_b != 0:
        row = i * block_b + jax.lax.broadcasted_iota(jnp.int32, (block_b, 1), 0)
        hinge_sum = jnp.where(row < batch, hinge_sum, 0.0)

    partial = jnp.sum(hinge_sum)                                   # scalar
    # lane-dense (1, 8, 128) output block; wrapper reads [:, 0, 0]
    out_ref[...] = jnp.broadcast_to(partial, (1, 8, 128))


# --------------------------------------------------------------------------- #
# Sizing helpers (generation / padding aware)
# --------------------------------------------------------------------------- #
def _vmem_capacity_bytes():
    try:
        return int(pltpu.get_tpu_info().vmem_capacity_bytes)
    except Exception:
        pass
    try:
        kind = jax.devices()[0].device_kind.lower()
        if "v7" in kind or "7x" in kind or "tpu7" in kind:
            return 64 * 1024 * 1024
    except Exception:
        pass
    return 128 * 1024 * 1024  # v5e / v6e


def _choose_block_b(batch, width, d_pad, emb_isz, vmem_cap):
    # double-buffered IO per row: flattened slab + lane-padded (x,128) inv_cnt
    per_row_io = 2 * (width * emb_isz + 128 * 4)
    # f32 compute temporaries / spill allowance (q32 + one slice + slack)
    per_row_tmp = 3 * d_pad * 4
    budget = vmem_cap // 2
    tb = budget // max(per_row_io + per_row_tmp, 1)
    tb = int(max(8, min(tb, 1024)))
    tb = (tb // 8) * 8
    # at least 2 grid tiles when B is modest, so v7x's two TensorCores both
    # get work (negligible extra grid-step cost on single-TC v5e/v6e)
    if batch >= 16:
        tb = min(tb, _round_up(-(-batch // 2), 8))
    tb = min(tb, _round_up(batch, 8))
    return max(8, (tb // 8) * 8)


# --------------------------------------------------------------------------- #
# Wrapper
# --------------------------------------------------------------------------- #
def ance_loss(query_emb, pos_emb, neg_emb, masks, *, margin=0.2, block_b=None):
    B, D = query_emb.shape
    P = pos_emb.shape[1]
    N = neg_emb.shape[1]
    emb_dtype = query_emb.dtype
    emb_isz = jnp.dtype(emb_dtype).itemsize

    d_pad = _round_up(D, 128)
    width = (1 + P + N) * d_pad

    vmem_cap = _vmem_capacity_bytes()
    if block_b is None:
        block_b = _choose_block_b(B, width, d_pad, emb_isz, vmem_cap)
    block_b = max(8, (int(block_b) // 8) * 8)
    block_b = min(block_b, _round_up(B, 8))

    b_pad = _round_up(B, block_b)
    num_tiles = b_pad // block_b

    # --- host-side layout prep (cheap XLA ops) ------------------------------
    # fold mask into positives (masked-out positives -> score exactly 0),
    # precompute 1/max(count, 1) per row, flatten everything into one
    # lane-dense (B, (1+P+N)*d_pad) slab.
    m32 = masks.astype(jnp.float32)
    inv_cnt = 1.0 / jnp.maximum(jnp.sum(m32, axis=1, keepdims=True), 1.0)  # (B,1) f32
    pos_masked = pos_emb * masks.astype(emb_dtype)[:, :, None]

    def pad_last(x):
        if d_pad == D:
            return x
        cfg = [(0, 0)] * (x.ndim - 1) + [(0, d_pad - D)]
        return jnp.pad(x, cfg)

    q2 = pad_last(query_emb)
    p2 = pad_last(pos_masked).reshape(B, P * d_pad)
    n2 = pad_last(neg_emb).reshape(B, N * d_pad)
    flat = jnp.concatenate([q2, p2, n2], axis=1)                   # (B, width)

    if b_pad != B:
        flat = jnp.pad(flat, ((0, b_pad - B), (0, 0)))
        inv_cnt = jnp.pad(inv_cnt, ((0, b_pad - B), (0, 0)))

    # --- VMEM / cost accounting (padding-aware) -----------------------------
    per_row_vmem = width * emb_isz + 128 * 4        # flat block + lane-padded inv_cnt
    needed = (2 * block_b * per_row_vmem            # double-buffered inputs
              + 2 * 8 * 128 * 4                     # double-buffered output
              + 4 * block_b * d_pad * 4             # f32 temporaries / spill
              + (4 << 20))                          # Mosaic scratch headroom
    vmem_limit = int(max(16 << 20, min(int(0.85 * vmem_cap), needed)))

    flops = b_pad * d_pad * (4 * (P + N) + 2)
    transcendentals = b_pad * (1 + P + N)
    bytes_accessed = b_pad * (width * emb_isz + 4) + num_tiles * 8 * 128 * 4

    kernel = functools.partial(
        ance_loss_kernel, margin=float(margin), batch=int(B),
        block_b=int(block_b), d=int(d_pad), num_pos=int(P), num_neg=int(N))

    out = pl.pallas_call(
        kernel,
        grid=(num_tiles,),
        in_specs=[
            pl.BlockSpec((block_b, width), lambda i: (i, 0)),
            pl.BlockSpec((block_b, 1), lambda i: (i, 0)),
        ],
        out_specs=pl.BlockSpec((1, 8, 128), lambda i: (i, 0, 0)),
        out_shape=jax.ShapeDtypeStruct((num_tiles, 8, 128), jnp.float32),
        compiler_params=pltpu.CompilerParams(
            dimension_semantics=("parallel",),
            vmem_limit_bytes=vmem_limit),
        cost_estimate=pl.CostEstimate(
            flops=int(flops),
            transcendentals=int(transcendentals),
            bytes_accessed=int(bytes_accessed)),
    )(flat, inv_cnt)

    total = jnp.sum(out[:, 0, 0])
    return total / float(B * N)


# --------------------------------------------------------------------------- #
# Pure-JAX reference (mirrors the PyTorch forward on precomputed embeddings)
# --------------------------------------------------------------------------- #
def _l2_normalize(x, eps=_EPS):
    norm = jnp.sqrt(jnp.sum(x * x, axis=-1, keepdims=True))
    return x / jnp.maximum(norm, eps)


def ance_loss_ref(query_emb, pos_emb, neg_emb, masks, *, margin=0.2):
    q = _l2_normalize(query_emb.astype(jnp.float32))
    pos = _l2_normalize(pos_emb.astype(jnp.float32))
    neg = _l2_normalize(neg_emb.astype(jnp.float32))
    m = masks.astype(jnp.float32)
    pos_scores = jnp.sum(q[:, None, :] * pos, axis=2)
    avg_pos = jnp.sum(pos_scores * m, axis=1) / jnp.maximum(jnp.sum(m, axis=1), 1.0)
    neg_scores = jnp.sum(q[:, None, :] * neg, axis=2)
    return jnp.mean(jnp.maximum(0.0, -(avg_pos[:, None] - neg_scores) + margin))


if __name__ == "__main__":
    # TODO(synk): SentenceTransformer encoding, tokenization, and faiss
    # hard-negative search have no Pallas equivalent; the kernel consumes
    # precomputed embeddings (query/pos/neg) plus the positives mask.
    B, P, N, D = 20, 4, 3, 128
    margin = 0.2

    key = jax.random.PRNGKey(0)
    kq, kp, kn = jax.random.split(key, 3)
    query_emb = jax.random.normal(kq, (B, D), dtype=jnp.float32)
    pos_emb = jax.random.normal(kp, (B, P, D), dtype=jnp.float32)
    neg_emb = jax.random.normal(kn, (B, N, D), dtype=jnp.float32)
    # deterministic padding mask over positives (at least one valid per row)
    masks = (jnp.arange(P)[None, :] <= (jnp.arange(B)[:, None] % P)).astype(jnp.float32)

    ref = ance_loss_ref(query_emb, pos_emb, neg_emb, masks, margin=margin)

    # f32 path; small explicit tile so the multi-tile grid + batch padding run
    loss = ance_loss(query_emb, pos_emb, neg_emb, masks, margin=margin, block_b=8)
    jax.block_until_ready(loss)
    assert jnp.allclose(loss, ref, atol=2e-5, rtol=2e-5), (loss, ref)

    # bf16 storage path (halves HBM traffic; norms/dots accumulated in f32), auto tile
    loss_bf16 = ance_loss(query_emb.astype(jnp.bfloat16),
                          pos_emb.astype(jnp.bfloat16),
                          neg_emb.astype(jnp.bfloat16),
                          masks, margin=margin)
    jax.block_until_ready(loss_bf16)
    assert jnp.allclose(loss_bf16, ref, atol=1e-2, rtol=1e-2), (loss_bf16, ref)

    print("KERNEL_OK")
</pallas_src>

<mosaic_0001>
module attributes {stable_mosaic.version = 11 : i64} {
  func.func @ance_loss_kernel(%arg0: i32, %arg1: memref<8x1024xf32, #tpu.memory_space<vmem>>, %arg2: memref<8x1xf32, #tpu.memory_space<vmem>>, %arg3: memref<1x8x128xf32, #tpu.memory_space<vmem>>) attributes {dimension_semantics = [#tpu.dimension_semantics<parallel>], iteration_bounds = array<i64: 3>, scalar_prefetch = 0 : i64, scratch_operands = 0 : i64, tpu.core_type = #tpu.core_type<tc>, window_params = [{transform_indices = @transform_0, window_bounds = array<i64: 8, 1024>}, {transform_indices = @transform_1, window_bounds = array<i64: 8, 1>}, {transform_indices = @transform_2, window_bounds = array<i64: 1, 8, 128>}]} {
    %c0 = arith.constant 0 : index
    %c0_0 = arith.constant 0 : index
    %0 = vector.load %arg1[%c0, %c0_0] : memref<8x1024xf32, #tpu.memory_space<vmem>>, vector<8x128xf32>
    %1 = arith.mulf %0, %0 : vector<8x128xf32>
    %cst = arith.constant dense<0.000000e+00> : vector<8xf32>
    %2 = vector.multi_reduction <add>, %1, %cst [1] : vector<8x128xf32> to vector<8xf32>
    %3 = vector.shape_cast %2 : vector<8xf32> to vector<8x1xf32>
    %cst_1 = arith.constant 1.000000e-24 : f32
    %4 = vector.broadcast %cst_1 : f32 to vector<8x1xf32>
    %5 = arith.maximumf %3, %4 : vector<8x1xf32>
    %6 = math.rsqrt %5 : vector<8x1xf32>
    %cst_2 = arith.constant 0.000000e+00 : f32
    %7 = vector.broadcast %cst_2 : f32 to vector<8x1xf32>
    %c0_3 = arith.constant 0 : index
    %c128 = arith.constant 128 : index
    %8 = vector.load %arg1[%c0_3, %c128] : memref<8x1024xf32, #tpu.memory_space<vmem>>, vector<8x128xf32>
    %9 = arith.mulf %8, %0 : vector<8x128xf32>
    %cst_4 = arith.constant dense<0.000000e+00> : vector<8xf32>
    %10 = vector.multi_reduction <add>, %9, %cst_4 [1] : vector<8x128xf32> to vector<8xf32>
    %11 = vector.shape_cast %10 : vector<8xf32> to vector<8x1xf32>
    %12 = arith.mulf %8, %8 : vector<8x128xf32>
    %cst_5 = arith.constant dense<0.000000e+00> : vector<8xf32>
    %13 = vector.multi_reduction <add>, %12, %cst_5 [1] : vector<8x128xf32> to vector<8xf32>
    %14 = vector.shape_cast %13 : vector<8xf32> to vector<8x1xf32>
    %cst_6 = arith.constant 1.000000e-24 : f32
    %15 = vector.broadcast %cst_6 : f32 to vector<8x1xf32>
    %16 = arith.maximumf %14, %15 : vector<8x1xf32>
    %17 = math.rsqrt %16 : vector<8x1xf32>
    %18 = arith.mulf %11, %17 : vector<8x1xf32>
    %19 = arith.addf %7, %18 : vector<8x1xf32>
    %c0_7 = arith.constant 0 : index
    %c256 = arith.constant 256 : index
    %20 = vector.load %arg1[%c0_7, %c256] : memref<8x1024xf32, #tpu.memory_space<vmem>>, vector<8x128xf32>
    %21 = arith.mulf %20, %0 : vector<8x128xf32>
    %cst_8 = arith.constant dense<0.000000e+00> : vector<8xf32>
    %22 = vector.multi_reduction <add>, %21, %cst_8 [1] : vector<8x128xf32> to vector<8xf32>
    %23 = vector.shape_cast %22 : vector<8xf32> to vector<8x1xf32>
    %24 = arith.mulf %20, %20 : vector<8x128xf32>
    %cst_9 = arith.constant dense<0.000000e+00> : vector<8xf32>
    %25 = vector.multi_reduction <add>, %24, %cst_9 [1] : vector<8x128xf32> to vector<8xf32>
    %26 = vector.shape_cast %25 : vector<8xf32> to vector<8x1xf32>
    %cst_10 = arith.constant 1.000000e-24 : f32
    %27 = vector.broadcast %cst_10 : f32 to vector<8x1xf32>
    %28 = arith.maximumf %26, %27 : vector<8x1xf32>
    %29 = math.rsqrt %28 : vector<8x1xf32>
    %30 = arith.mulf %23, %29 : vector<8x1xf32>
    %31 = arith.addf %19, %30 : vector<8x1xf32>
    %c0_11 = arith.constant 0 : index
    %c384 = arith.constant 384 : index
    %32 = vector.load %arg1[%c0_11, %c384] : memref<8x1024xf32, #tpu.memory_space<vmem>>, vector<8x128xf32>
    %33 = arith.mulf %32, %0 : vector<8x128xf32>
    %cst_12 = arith.constant dense<0.000000e+00> : vector<8xf32>
    %34 = vector.multi_reduction <add>, %33, %cst_12 [1] : vector<8x128xf32> to vector<8xf32>
    %35 = vector.shape_cast %34 : vector<8xf32> to vector<8x1xf32>
    %36 = arith.mulf %32, %32 : vector<8x128xf32>
    %cst_13 = arith.constant dense<0.000000e+00> : vector<8xf32>
    %37 = vector.multi_reduction <add>, %36, %cst_13 [1] : vector<8x128xf32> to vector<8xf32>
    %38 = vector.shape_cast %37 : vector<8xf32> to vector<8x1xf32>
    %cst_14 = arith.constant 1.000000e-24 : f32
    %39 = vector.broadcast %cst_14 : f32 to vector<8x1xf32>
    %40 = arith.maximumf %38, %39 : vector<8x1xf32>
    %41 = math.rsqrt %40 : vector<8x1xf32>
    %42 = arith.mulf %35, %41 : vector<8x1xf32>
    %43 = arith.addf %31, %42 : vector<8x1xf32>
    %c0_15 = arith.constant 0 : index
    %c512 = arith.constant 512 : index
    %44 = vector.load %arg1[%c0_15, %c512] : memref<8x1024xf32, #tpu.memory_space<vmem>>, vector<8x128xf32>
    %45 = arith.mulf %44, %0 : vector<8x128xf32>
    %cst_16 = arith.constant dense<0.000000e+00> : vector<8xf32>
    %46 = vector.multi_reduction <add>, %45, %cst_16 [1] : vector<8x128xf32> to vector<8xf32>
    %47 = vector.shape_cast %46 : vector<8xf32> to vector<8x1xf32>
    %48 = arith.mulf %44, %44 : vector<8x128xf32>
    %cst_17 = arith.constant dense<0.000000e+00> : vector<8xf32>
    %49 = vector.multi_reduction <add>, %48, %cst_17 [1] : vector<8x128xf32> to vector<8xf32>
    %50 = vector.shape_cast %49 : vector<8xf32> to vector<8x1xf32>
    %cst_18 = arith.constant 1.000000e-24 : f32
    %51 = vector.broadcast %cst_18 : f32 to vector<8x1xf32>
    %52 = arith.maximumf %50, %51 : vector<8x1xf32>
    %53 = math.rsqrt %52 : vector<8x1xf32>
    %54 = arith.mulf %47, %53 : vector<8x1xf32>
    %55 = arith.addf %43, %54 : vector<8x1xf32>
    %56 = arith.mulf %55, %6 : vector<8x1xf32>
    %c0_19 = arith.constant 0 : index
    %c0_20 = arith.constant 0 : index
    %57 = vector.load %arg2[%c0_19, %c0_20] : memref<8x1xf32, #tpu.memory_space<vmem>>, vector<8x1xf32>
    %58 = arith.mulf %56, %57 : vector<8x1xf32>
    %cst_21 = arith.constant 0.000000e+00 : f32
    %59 = vector.broadcast %cst_21 : f32 to vector<8x1xf32>
    %c0_22 = arith.constant 0 : index
    %c640 = arith.constant 640 : index
    %60 = vector.load %arg1[%c0_22, %c640] : memref<8x1024xf32, #tpu.memory_space<vmem>>, vector<8x128xf32>
    %61 = arith.mulf %60, %0 : vector<8x128xf32>
    %cst_23 = arith.constant dense<0.000000e+00> : vector<8xf32>
    %62 = vector.multi_reduction <add>, %61, %cst_23 [1] : vector<8x128xf32> to vector<8xf32>
    %63 = vector.shape_cast %62 : vector<8xf32> to vector<8x1xf32>
    %64 = arith.mulf %60, %60 : vector<8x128xf32>
    %cst_24 = arith.constant dense<0.000000e+00> : vector<8xf32>
    %65 = vector.multi_reduction <add>, %64, %cst_24 [1] : vector<8x128xf32> to vector<8xf32>
    %66 = vector.shape_cast %65 : vector<8xf32> to vector<8x1xf32>
    %cst_25 = arith.constant 1.000000e-24 : f32
    %67 = vector.broadcast %cst_25 : f32 to vector<8x1xf32>
    %68 = arith.maximumf %66, %67 : vector<8x1xf32>
    %69 = math.rsqrt %68 : vector<8x1xf32>
    %70 = arith.mulf %63, %69 : vector<8x1xf32>
    %71 = arith.mulf %70, %6 : vector<8x1xf32>
    %72 = arith.subf %71, %58 : vector<8x1xf32>
    %cst_26 = arith.constant 2.000000e-01 : f32
    %73 = vector.broadcast %cst_26 : f32 to vector<8x1xf32>
    %74 = arith.addf %72, %73 : vector<8x1xf32>
    %cst_27 = arith.constant 0.000000e+00 : f32
    %75 = vector.broadcast %cst_27 : f32 to vector<8x1xf32>
    %76 = arith.maximumf %74, %75 : vector<8x1xf32>
    %77 = arith.addf %59, %76 : vector<8x1xf32>
    %c0_28 = arith.constant 0 : index
    %c768 = arith.constant 768 : index
    %78 = vector.load %arg1[%c0_28, %c768] : memref<8x1024xf32, #tpu.memory_space<vmem>>, vector<8x128xf32>
    %79 = arith.mulf %78, %0 : vector<8x128xf32>
    %cst_29 = arith.constant dense<0.000000e+00> : vector<8xf32>
    %80 = vector.multi_reduction <add>, %79, %cst_29 [1] : vector<8x128xf32> to vector<8xf32>
    %81 = vector.shape_cast %80 : vector<8xf32> to vector<8x1xf32>
    %82 = arith.mulf %78, %78 : vector<8x128xf32>
    %cst_30 = arith.constant dense<0.000000e+00> : vector<8xf32>
    %83 = vector.multi_reduction <add>, %82, %cst_30 [1] : vector<8x128xf32> to vector<8xf32>
    %84 = vector.shape_cast %83 : vector<8xf32> to vector<8x1xf32>
    %cst_31 = arith.constant 1.000000e-24 : f32
    %85 = vector.broadcast %cst_31 : f32 to vector<8x1xf32>
    %86 = arith.maximumf %84, %85 : vector<8x1xf32>
    %87 = math.rsqrt %86 : vector<8x1xf32>
    %88 = arith.mulf %81, %87 : vector<8x1xf32>
    %89 = arith.mulf %88, %6 : vector<8x1xf32>
    %90 = arith.subf %89, %58 : vector<8x1xf32>
    %cst_32 = arith.constant 2.000000e-01 : f32
    %91 = vector.broadcast %cst_32 : f32 to vector<8x1xf32>
    %92 = arith.addf %90, %91 : vector<8x1xf32>
    %cst_33 = arith.constant 0.000000e+00 : f32
    %93 = vector.broadcast %cst_33 : f32 to vector<8x1xf32>
    %94 = arith.maximumf %92, %93 : vector<8x1xf32>
    %95 = arith.addf %77, %94 : vector<8x1xf32>
    %c0_34 = arith.constant 0 : index
    %c896 = arith.constant 896 : index
    %96 = vector.load %arg1[%c0_34, %c896] : memref<8x1024xf32, #tpu.memory_space<vmem>>, vector<8x128xf32>
    %97 = arith.mulf %96, %0 : vector<8x128xf32>
    %cst_35 = arith.constant dense<0.000000e+00> : vector<8xf32>
    %98 = vector.multi_reduction <add>, %97, %cst_35 [1] : vector<8x128xf32> to vector<8xf32>
    %99 = vector.shape_cast %98 : vector<8xf32> to vector<8x1xf32>
    %100 = arith.mulf %96, %96 : vector<8x128xf32>
    %cst_36 = arith.constant dense<0.000000e+00> : vector<8xf32>
    %101 = vector.multi_reduction <add>, %100, %cst_36 [1] : vector<8x128xf32> to vector<8xf32>
    %102 = vector.shape_cast %101 : vector<8xf32> to vector<8x1xf32>
    %cst_37 = arith.constant 1.000000e-24 : f32
    %103 = vector.broadcast %cst_37 : f32 to vector<8x1xf32>
    %104 = arith.maximumf %102, %103 : vector<8x1xf32>
    %105 = math.rsqrt %104 : vector<8x1xf32>
    %106 = arith.mulf %99, %105 : vector<8x1xf32>
    %107 = arith.mulf %106, %6 : vector<8x1xf32>
    %108 = arith.subf %107, %58 : vector<8x1xf32>
    %cst_38 = arith.constant 2.000000e-01 : f32
    %109 = vector.broadcast %cst_38 : f32 to vector<8x1xf32>
    %110 = arith.addf %108, %109 : vector<8x1xf32>
    %cst_39 = arith.constant 0.000000e+00 : f32
    %111 = vector.broadcast %cst_39 : f32 to vector<8x1xf32>
    %112 = arith.maximumf %110, %111 : vector<8x1xf32>
    %113 = arith.addf %95, %112 : vector<8x1xf32>
    %c8_i32 = arith.constant 8 : i32
    %114 = arith.muli %arg0, %c8_i32 : i32
    %115 = tpu.iota {dimensions = array<i32: 0>} : vector<8x1xi32>
    %116 = vector.broadcast %114 : i32 to vector<8x1xi32>
    %117 = arith.addi %116, %115 : vector<8x1xi32>
    %c20_i32 = arith.constant 20 : i32
    %118 = vector.broadcast %c20_i32 : i32 to vector<8x1xi32>
    %119 = arith.cmpi slt, %117, %118 : vector<8x1xi32>
    %cst_40 = arith.constant 0.000000e+00 : f32
    %120 = vector.broadcast %cst_40 : f32 to vector<8x1xf32>
    %121 = arith.select %119, %113, %120 : vector<8x1xi1>, vector<8x1xf32>
    %122 = vector.shape_cast %121 : vector<8x1xf32> to vector<1x8x1xf32>
    %cst_41 = arith.constant dense<0.000000e+00> : vector<1xf32>
    %123 = vector.multi_reduction <add>, %122, %cst_41 [1, 2] : vector<1x8x1xf32> to vector<1xf32>
    %124 = vector.shape_cast %123 : vector<1xf32> to vector<1x1x1xf32>
    %125 = vector.extract %124[0, 0, 0] : f32 from vector<1x1x1xf32>
    %126 = vector.broadcast %125 : f32 to vector<1x8x128xf32>
    %c0_42 = arith.constant 0 : index
    %c0_43 = arith.constant 0 : index
    %c0_44 = arith.constant 0 : index
    %127 = vector.load %arg3[%c0_42, %c0_43, %c0_44] : memref<1x8x128xf32, #tpu.memory_space<vmem>>, vector<1x8x128xf32>
    tpu.vector_store %arg3[%c0_42, %c0_43, %c0_44], %126 {strides = array<i32>} : memref<1x8x128xf32, #tpu.memory_space<vmem>>, vector<1x8x128xf32>,
    return
  }
  func.func @transform_0(%arg0: i32) -> (i32, i32) {
    %c0_i32 = arith.constant 0 : i32
    %c0_i32_0 = arith.constant 0 : i32
    return %arg0, %c0_i32 : i32, i32
  }
  func.func @transform_1(%arg0: i32) -> (i32, i32) {
    %c0_i32 = arith.constant 0 : i32
    %c0_i32_0 = arith.constant 0 : i32
    return %arg0, %c0_i32 : i32, i32
  }
  func.func @transform_2(%arg0: i32) -> (i32, i32, i32) {
    %c0_i32 = arith.constant 0 : i32
    %c0_i32_0 = arith.constant 0 : i32
    %c0_i32_1 = arith.constant 0 : i32
    return %arg0, %c0_i32, %c0_i32_0 : i32, i32, i32
  }
}

</mosaic_0001>

<llo_original>
// kernel: tpu_custom_call.1
$region0: #{tpu_custom_call.1}
  #allocation0 [shape = 'u32[]', space=smem, size = 0x4, offset = 0x4, fixed_abs, tag = 'smem constant byte address 0x4 - core index']
  #allocation1 [shape = 'u32[144,128]{1,0:T(1,128)}', space=vmem, size = 0x12000, scoped, tag = 'internal scratch']
  %s0 = inlined_call_operand.hbm [shape: f32[24,1024], index: 0, kind: input, shape index: {}]
  %s1 = inlined_call_operand.vmem [shape: f32[24,1], index: 1, kind: input, shape index: {}]
  %s2 = inlined_call_operand.hbm [shape: f32[3,8,128], index: 2, kind: output, shape index: {}]
  %s3 = sld [smem:[#allocation0]]
  $region45: #{tpu_custom_call.1} parent=0
    _
  %s5 = ssub.s32 1, %s3
  %s6 = scalar_select 0, %s5, %s3
  $region1: #{tpu_custom_call.1} parent=0
    #allocation2 [shape = 'u8[65536]{0}', space=vmem, size = 0x10000, scoped, tag = 'input window, operand 0']
    #allocation3 [shape = 's32[2]{0}', space=sflag, size = 0x8, scoped, tag = 'scoped memory for tpu_custom_call.1']
    #allocation4 [shape = 's32[2]{0}', space=sflag, size = 0x8, scoped, tag = 'scoped memory for tpu_custom_call.1']
    #allocation5 [shape = 'u8[8192]{0}', space=vmem, size = 0x2000, scoped, tag = 'output window, operand 0']
    %7 = vsyncpa [#allocation3], 0
    %s8 = scalar_lea.sflag [#allocation3], 1
    %9 = vsyncpa %s8, 0
    %10 = vsyncpa [#allocation4], 0
    %s11 = scalar_lea.sflag [#allocation4], 1
    %12 = vsyncpa %s11, 0
    loop: start=0, step=1, limit=5
    $region2: #{tpu_custom_call.1} parent=1 // loop_pre_header
      _
    $region3: #{tpu_custom_call.1} parent=1 // loop_header
      %s14 = sphi 0, %s18
      %p15 = scmp.ge.s32.totalorder %s14, 5
      %s24 = sphi 0, %s26
      %s27 = sphi 0, %s24
      %s28 = sphi 0, %s27
      %s44 = sphi 0, %s28
      %s50 = sphi 0, %s52
      %s53 = sphi 0, %s50
      %s54 = sphi 0, %s53
      %s70 = sphi 0, %s54
      %s76 = sphi 0, %s78
      %s79 = sphi 0, %s76
      %s80 = sphi 0, %s79
      %s96 = sphi 0, %s80
    $region4: #{tpu_custom_call.1} parent=1 // loop_header_branch
      %17 = sbr.rel (%p15) target = $region8
    $region5: #{tpu_custom_call.1} parent=1 // loop_body
      %s19 = ssub.s32 %s14, 1
      %s20 = ssub.s32 %s14, 2
      %s21 = sadd.s32 %s14, 1
      %s22 = ssub.s32 %s14, %s21
      %p23 = scmp.eq.s32.totalorder %s22, 0
      %s25 = sadd.s32 %s24, 1
      %s26 = scalar_select %p23, %s24, %s25
      %p29 = pneg %p23
      %p30 = scmp.eq.s32.totalorder %s14, 2
      %p31 = por %p29, %p30
      %p32 = scmp.ne.s32.totalorder %s24, %s27
      %p33 = scmp.eq.s32.totalorder %s14, 0
      %p34 = por %p32, %p33
      %p35 = scmp.ne.s32.totalorder %s24, %s27
      %p36 = scmp.eq.s32.totalorder %s19, 2
      %p37 = por %p35, %p36
      %p38 = scmp.ne.s32.totalorder %s27, %s28
      %p39 = scmp.eq.s32.totalorder %s19, 0
      %p40 = por %p38, %p39
      %p41 = scmp.ne.s32.totalorder %s27, %s28
      %p42 = scmp.eq.s32.totalorder %s20, 2
      %p43 = por %p41, %p42
      %p45 = scmp.ne.s32.totalorder %s28, %s44
      %p46 = scmp.eq.s32.totalorder %s20, 0
      %p47 = por %p45, %p46
      %s48 = ssub.s32 %s14, %s21
      %p49 = scmp.eq.s32.totalorder %s48, 0
      %s51 = sadd.s32 %s50, 1
      %s52 = scalar_select %p49, %s50, %s51
      %p55 = pneg %p49
      %p56 = scmp.eq.s32.totalorder %s14, 2
      %p57 = por %p55, %p56
      %p58 = scmp.ne.s32.totalorder %s50, %s53
      %p59 = scmp.eq.s32.totalorder %s14, 0
      %p60 = por %p58, %p59
      %p61 = scmp.ne.s32.totalorder %s50, %s53
      %p62 = scmp.eq.s32.totalorder %s19, 2
      %p63 = por %p61, %p62
      %p64 = scmp.ne.s32.totalorder %s53, %s54
      %p65 = scmp.eq.s32.totalorder %s19, 0
      %p66 = por %p64, %p65
      %p67 = scmp.ne.s32.totalorder %s53, %s54
      %p68 = scmp.eq.s32.totalorder %s20, 2
      %p69 = por %p67, %p68
      %p71 = scmp.ne.s32.totalorder %s54, %s70
      %p72 = scmp.eq.s32.totalorder %s20, 0
      %p73 = por %p71, %p72
      %s74 = ssub.s32 %s14, %s21
      %p75 = scmp.eq.s32.totalorder %s74, 0
      %s77 = sadd.s32 %s76, 1
      %s78 = scalar_select %p75, %s76, %s77
      %p81 = pneg %p75
      %p82 = scmp.eq.s32.totalorder %s14, 2
      %p83 = por %p81, %p82
      %p84 = scmp.ne.s32.totalorder %s76, %s79
      %p85 = scmp.eq.s32.totalorder %s14, 0
      %p86 = por %p84, %p85
      %p87 = scmp.ne.s32.totalorder %s76, %s79
      %p88 = scmp.eq.s32.totalorder %s19, 2
      %p89 = por %p87, %p88
      %p90 = scmp.ne.s32.totalorder %s79, %s80
      %p91 = scmp.eq.s32.totalorder %s19, 0
      %p92 = por %p90, %p91
      %p93 = scmp.ne.s32.totalorder %s79, %s80
      %p94 = scmp.eq.s32.totalorder %s20, 2
      %p95 = por %p93, %p94
      %p97 = scmp.ne.s32.totalorder %s80, %s96
      %p98 = scmp.eq.s32.totalorder %s20, 0
      %p99 = por %p97, %p98
      %p100 = scmp.le.s32.totalorder 1, %s14
      %p101 = scmp.lt.s32.totalorder %s14, 4
      %p102 = pnand %p100, %p101
      %p103 = pneg %p102
      // Predicated region
      $region9: #{tpu_custom_call.1} parent=5 // pred_check
        _
      $region10: #{tpu_custom_call.1} parent=5 // pred_check_branch
        %105 = sbr.rel (%p102) target = $region12
      $region11: #{tpu_custom_call.1} parent=5 // pred_region
        %s106 = ssub.s32 %s14, 1
      $region12: #{tpu_custom_call.1} parent=5 // pred_fallthru
        _
      %p107 = scmp.lt.s32.totalorder %s14, 3
      // Predicated region
      $region13: #{tpu_custom_call.1} parent=5 // pred_check
        %p108 = pneg %p107
      $region14: #{tpu_custom_call.1} parent=5 // pred_check_branch
        %110 = sbr.rel (%p108) target = $region16
      $region15: #{tpu_custom_call.1} parent=5 // pred_region
        // Predicated region
        $region17: #{tpu_custom_call.1} parent=15 // pred_check
          %p111 = pneg %p34
        $region18: #{tpu_custom_call.1} parent=15 // pred_check_branch
          %113 = sbr.rel (%p111) target = $region20
        $region19: #{tpu_custom_call.1} parent=15 // pred_region
          %s114 = sand.u32 %s24, 1
          %s115 = scalar_lea.sflag [#allocation3], %s114
          %s116 = sand.u32 %s24, 1
          %s117 = smul.addr %s116, 64
          %s118 = scalar_lea.vmem [#allocation2], %s117
          %s120 = ssub.s32 1024, 1024
          %121 = vsyncadd %s115, %s120
          %s122 = smul.addr %s14, 8
          %s123 = smul.addr %s122, 128
          %s124 = scalar_lea.hbm %s0, %s123
          %s126 = sshll.u32 %s118, 4
          %s127 = int_to_ptr.vmem [resolvable:$true] %s126
          %129 = dma.hbm_to_vmem [thread:$0]  %s124, 1024, %s127, %s115
        $region20: #{tpu_custom_call.1} parent=15 // pred_fallthru
          _
        // Predicated region
        $region21: #{tpu_custom_call.1} parent=15 // pred_check
          %p130 = pneg %p60
        $region22: #{tpu_custom_call.1} parent=15 // pred_check_branch
          %132 = sbr.rel (%p130) target = $region24
        $region23: #{tpu_custom_call.1} parent=15 // pred_region
          %p133 = scmp.lt.s32.totalorder %s14, 2
          %s134 = scalar_select %p133, %s14, 2
          %s135 = smul.addr %s134, 8
          %s136 = scalar_lea.vmem %s1, %s135
        $region24: #{tpu_custom_call.1} parent=15 // pred_fallthru
          _
      $region16: #{tpu_custom_call.1} parent=5 // pred_fallthru
        _
      %p137 = scmp.le.s32.totalorder 1, %s14
      %p138 = scmp.lt.s32.totalorder %s14, 4
      %p139 = pnand %p137, %p138
      %p140 = pneg %p139
      // Predicated region
      $region25: #{tpu_custom_call.1} parent=5 // pred_check
        _
      $region26: #{tpu_custom_call.1} parent=5 // pred_check_branch
        %142 = sbr.rel (%p139) target = $region28
      $region27: #{tpu_custom_call.1} parent=5 // pred_region
        %s143 = ssub.s32 %s14, 1
        %s144 = sand.u32 %s27, 1
        %s145 = scalar_lea.sflag [#allocation3], %s144
        %s146 = sand.u32 %s27, 1
        %s147 = smul.addr %s146, 64
        %s148 = scalar_lea.vmem [#allocation2], %s147
        // Predicated region
        $region29: #{tpu_custom_call.1} parent=27 // pred_check
          %p149 = pneg %p40
        $region30: #{tpu_custom_call.1} parent=27 // pred_check_branch
          %151 = sbr.rel (%p149) target = $region32
        $region31: #{tpu_custom_call.1} parent=27 // pred_region
          %152 = dma.done %s145, 1024
        $region32: #{tpu_custom_call.1} parent=27 // pred_fallthru
          _
        %s153 = sand.u32 %s27, 1
        %s154 = scalar_lea.sflag [#allocation3], %s153
        %s155 = sand.u32 %s27, 1
        %s156 = smul.addr %s155, 64
        %s157 = scalar_lea.vmem [#allocation2], %s156
        %p158 = pneg %p40
        %p159 = pneg %p37
        %p160 = scmp.lt.s32.totalorder %s19, 2
        %s161 = scalar_select %p160, %s19, 2
        %s162 = smul.addr %s161, 8
        %s163 = scalar_lea.vmem %s1, %s162
        %p164 = pneg %p66
        %p165 = pneg %p63
        %p166 = pneg %p92
        %p167 = pneg %p89
        %s168 = sand.u32 %s79, 1
        %s169 = scalar_lea.sflag [#allocation4], %s168
        %s170 = sand.u32 %s79, 1
        %s171 = smul.addr %s170, 8
        %s172 = scalar_lea.vmem [#allocation5], %s171
        %p173 = scmp.lt.s32.totalorder %s19, 2
        %s174 = scalar_select %p173, %s19, 2
        %s175 = smul.addr %s174, 8
        %s176 = scalar_lea.vmem %s1, %s175
        %v177 = vld [vmem:[%s148] sm:$0xff]
        %v178 = vmul.f32 %v177, %v177
        %179 = vadd.xlane.f32.xlu0 %v178
        %v180 = vpop.xlane.xlu0 %179
        %v181 = vmax.f32 %v180, 1e-24
        %v182 = vrsqrt.pop %v181
        %v183 = vld [vmem:[%s148 + $0x8] sm:$0xff]
        %v184 = vmul.f32 %v183, %v177
        %185 = vadd.xlane.f32.xlu0 %v184
        %v186 = vpop.xlane.xlu0 %185
        %v187 = vmul.f32 %v183, %v183
        %188 = vadd.xlane.f32.xlu0 %v187
        %v189 = vpop.xlane.xlu0 %188
        %v190 = vmax.f32 %v189, 1e-24
        %v191 = vrsqrt.pop %v190
        %v192 = vmul.f32 %v186, %v191
        %v193 = vadd.f32 %v192, 0.0
        %v194 = vld [vmem:[%s148 + $0x10] sm:$0xff]
        %v195 = vmul.f32 %v194, %v177
        %196 = vadd.xlane.f32.xlu0 %v195
        %v197 = vpop.xlane.xlu0 %196
        %v198 = vmul.f32 %v194, %v194
        %199 = vadd.xlane.f32.xlu0 %v198
        %v200 = vpop.xlane.xlu0 %199
        %v201 = vmax.f32 %v200, 1e-24
        %v202 = vrsqrt.pop %v201
        %v203 = vmul.f32 %v197, %v202
        %v204 = vadd.f32 %v193, %v203
        %v205 = vld [vmem:[%s148 + $0x18] sm:$0xff]
        %v206 = vmul.f32 %v205, %v177
        %207 = vadd.xlane.f32.xlu0 %v206
        %v208 = vpop.xlane.xlu0 %207
        %v209 = vmul.f32 %v205, %v205
        %210 = vadd.xlane.f32.xlu0 %v209
        %v211 = vpop.xlane.xlu0 %210
        %v212 = vmax.f32 %v211, 1e-24
        %v213 = vrsqrt.pop %v212
        %v214 = vmul.f32 %v208, %v213
        %v215 = vadd.f32 %v204, %v214
        %v216 = vld [vmem:[%s148 + $0x20] sm:$0xff]
        %v217 = vmul.f32 %v216, %v177
        %218 = vadd.xlane.f32.xlu0 %v217
        %v219 = vpop.xlane.xlu0 %218
        %v220 = vmul.f32 %v216, %v216
        %221 = vadd.xlane.f32.xlu0 %v220
        %v222 = vpop.xlane.xlu0 %221
        %v223 = vmax.f32 %v222, 1e-24
        %v224 = vrsqrt.pop %v223
        %v225 = vmul.f32 %v219, %v224
        %v226 = vadd.f32 %v215, %v225
        %v227 = vmul.f32 %v226, %v182
        %v228 = vld [vmem:[%s176] sm:$0xff]
        %v229 = vmul.f32 %v227, %v228
        %v230 = vld [vmem:[%s148 + $0x28] sm:$0xff]
        %v231 = vmul.f32 %v230, %v177
        %232 = vadd.xlane.f32.xlu0 %v231
        %v233 = vpop.xlane.xlu0 %232
        %v234 = vmul.f32 %v230, %v230
        %235 = vadd.xlane.f32.xlu0 %v234
        %v236 = vpop.xlane.xlu0 %235
        %v237 = vmax.f32 %v236, 1e-24
        %v238 = vrsqrt.pop %v237
        %v239 = vmul.f32 %v233, %v238
        %v240 = vmul.f32 %v239, %v182
        %v241 = vsub.f32 %v240, %v229
        %v242 = vadd.f32 %v241, 0.2
        %v243 = vmax.f32 %v242, 0.0
        %v244 = vadd.f32 %v243, 0.0
        %v245 = vld [vmem:[%s148 + $0x30] sm:$0xff]
        %v246 = vmul.f32 %v245, %v177
        %247 = vadd.xlane.f32.xlu0 %v246
        %v248 = vpop.xlane.xlu0 %247
        %v249 = vmul.f32 %v245, %v245
        %250 = vadd.xlane.f32.xlu0 %v249
        %v251 = vpop.xlane.xlu0 %250
        %v252 = vmax.f32 %v251, 1e-24
        %v253 = vrsqrt.pop %v252
        %v254 = vmul.f32 %v248, %v253
        %v255 = vmul.f32 %v254, %v182
        %v256 = vsub.f32 %v255, %v229
        %v257 = vadd.f32 %v256, 0.2
        %v258 = vmax.f32 %v257, 0.0
        %v259 = vadd.f32 %v244, %v258
        %v260 = vld [vmem:[%s148 + $0x38] sm:$0xff]
        %v261 = vmul.f32 %v260, %v177
        %262 = vadd.xlane.f32.xlu0 %v261
        %v263 = vpop.xlane.xlu0 %262
        %v264 = vmul.f32 %v260, %v260
        %265 = vadd.xlane.f32.xlu0 %v264
        %v266 = vpop.xlane.xlu0 %265
        %v267 = vmax.f32 %v266, 1e-24
        %v268 = vrsqrt.pop %v267
        %v269 = vmul.f32 %v263, %v268
        %v270 = vmul.f32 %v269, %v182
        %v271 = vsub.f32 %v270, %v229
        %v272 = vadd.f32 %v271, 0.2
        %v273 = vmax.f32 %v272, 0.0
        %v274 = vadd.f32 %v259, %v273
        %s275 = smul.u32 %s19, 8
        %v276 = vlaneseq
        %v277 = vshrl.u32 %v276, 7
        %v278 = vstv %s275
        %v279 = vadd.s32 %v278, %v277
        %vm280 = vcmp.lt.s32.totalorder %v279, 20
        %v281 = vsel %vm280, %v274, 0.0
        %vm282 = vcmask 7168
        %v283 = vsel %vm282, %v281, 0.0
        %284 = vadd.xlane.f32.xlu0 %v283
        %v285 = vpop.xlane.xlu0 %284
        %v286 = vrot.slane %v285, 4
        %v287 = vadd.f32 %v285, %v286
        %v288 = vrot.slane %v287, 2
        %v289 = vadd.f32 %v287, %v288
        %v290 = vrot.slane %v289, 1
        %v291 = vadd.f32 %v289, %v290
        %s292 = vtos %v291
        %v293 = vstv %s292
        %294 = vst [vmem:[%s172] sm:$0xff] %v293
        %s295 = sand.u32 %s79, 1
        %s296 = scalar_lea.sflag [#allocation4], %s295
        %s297 = sand.u32 %s79, 1
        %s298 = smul.addr %s297, 8
        %s299 = scalar_lea.vmem [#allocation5], %s298
        // Predicated region
        $region33: #{tpu_custom_call.1} parent=27 // pred_check
          %p300 = pneg %p89
        $region34: #{tpu_custom_call.1} parent=27 // pred_check_branch
          %302 = sbr.rel (%p300) target = $region36
        $region35: #{tpu_custom_call.1} parent=27 // pred_region
          %s304 = ssub.s32 128, 128
          %305 = vsyncadd %s296, %s304
          %s306 = smul.addr %s19, 128
          %s307 = scalar_lea.hbm %s2, %s306
          %s309 = sshll.u32 %s299, 4
          %s310 = int_to_ptr.vmem [resolvable:$true] %s309
          %312 = dma.vmem_to_hbm [thread:$0]  %s310, 128, %s307, %s296
        $region36: #{tpu_custom_call.1} parent=27 // pred_fallthru
          _
      $region28: #{tpu_custom_call.1} parent=5 // pred_fallthru
        _
      %p313 = scmp.le.s32.totalorder 2, %s14
      // Predicated region
      $region37: #{tpu_custom_call.1} parent=5 // pred_check
        %p314 = pneg %p313
      $region38: #{tpu_custom_call.1} parent=5 // pred_check_branch
        %316 = sbr.rel (%p314) target = $region40
      $region39: #{tpu_custom_call.1} parent=5 // pred_region
        %s317 = ssub.s32 %s14, 2
        // Predicated region
        $region41: #{tpu_custom_call.1} parent=39 // pred_check
          %p318 = pneg %p95
        $region42: #{tpu_custom_call.1} parent=39 // pred_check_branch
          %320 = sbr.rel (%p318) target = $region44
        $region43: #{tpu_custom_call.1} parent=39 // pred_region
          %s321 = sand.u32 %s80, 1
          %s322 = scalar_lea.sflag [#allocation4], %s321
          %s323 = sand.u32 %s80, 1
          %s324 = smul.addr %s323, 8
          %s325 = scalar_lea.vmem [#allocation5], %s324
          %326 = dma.done %s322, 128
        $region44: #{tpu_custom_call.1} parent=39 // pred_fallthru
          _
      $region40: #{tpu_custom_call.1} parent=5 // pred_fallthru
        _
    $region6: #{tpu_custom_call.1} parent=1 // loop_footer
      %s18 = sadd.s32 1, %s14
    $region7: #{tpu_custom_call.1} parent=1 // loop_footer_branch
      %13 = sbr.rel target = $region3
    $region8: #{tpu_custom_call.1} parent=1 // loop_exit
      _
    %327 = vsyncpa [#allocation3], 1
    %s328 = scalar_lea.sflag [#allocation3], 1
    %329 = vsyncpa %s328, 1
    %330 = vsyncpa [#allocation4], 1
    %s331 = scalar_lea.sflag [#allocation4], 1
    %332 = vsyncpa %s331, 1

</llo_original>
